<compile_context>
chip_gen: v7x
topology: tpu7x:2x2x1
jax: 0.10.0
libtpu: 0.0.40
codegen_flags: <defaults>
</compile_context>

<pallas_src>
import functools
import math

import jax
import jax.numpy as jnp
from jax import lax
from jax.experimental import pallas as pl
from jax.experimental.pallas import tpu as pltpu


def _arcface_kernel(lb_ref, costh_ref, nll_ref, m_sc, l_sc, t_sc, *opt_scratch,
                    cos_m, sin_m, th, mm, s, label_smooth, easy_margin,
                    num_classes):
    c = pl.program_id(1)
    n_c = pl.num_programs(1)
    tb, tc = costh_ref.shape
    sum_sc = opt_scratch[0] if label_smooth > 0.0 else None

    @pl.when(c == 0)
    def _():
        m_sc[...] = jnp.full((tb, 1), -jnp.inf, jnp.float32)
        l_sc[...] = jnp.zeros((tb, 1), jnp.float32)
        t_sc[...] = jnp.zeros((tb, 1), jnp.float32)
        if label_smooth > 0.0:
            sum_sc[...] = jnp.zeros((tb, 1), jnp.float32)

    costh = costh_ref[...].astype(jnp.float32)     # (tb, tc); bf16 stays bf16 in HBM
    lb = lb_ref[...]                               # (tb, 1) int32

    # one_hot.scatter_(1, lb, 1) equivalent: target-column mask for this C-tile.
    col = lax.broadcasted_iota(jnp.int32, (tb, tc), 1)
    local_lb = lb - c * tc                         # (tb, 1)
    mask = col == local_lb                         # (tb, tc) bool
    has_tgt = (local_lb >= 0) & (local_lb < tc)    # (tb, 1)  bool

    # Margin math only on the target column ((tb,1) vector work, not full-tile).
    tgt_cos = jnp.sum(jnp.where(mask, costh, 0.0), axis=1, keepdims=True)
    sine = jnp.sqrt(jnp.clip(1.0 - tgt_cos * tgt_cos, 0.0, 1.0))
    phi = tgt_cos * cos_m - sine * sin_m
    if easy_margin:
        phi = jnp.where(tgt_cos > 0.0, phi, tgt_cos)
    else:
        phi = jnp.where(tgt_cos > th, phi, tgt_cos - mm)

    # Raw logits s*costh. The margin only LOWERS the target logit (phi <= tgt_cos
    # for m in (0, pi/2] under both branches), so the raw running max is a valid
    # logsumexp upper bound and the margin enters only as a (tb,1) correction.
    s_costh = s * costh                            # (tb, tc)
    tile_max = jnp.max(s_costh, axis=1, keepdims=True)
    m_new = jnp.maximum(m_sc[...], tile_max)
    alpha = jnp.exp(m_sc[...] - m_new)
    tile_sum = jnp.sum(jnp.exp(s_costh - m_new), axis=1, keepdims=True)
    corr = jnp.where(has_tgt,
                     jnp.exp(s * phi - m_new) - jnp.exp(s * tgt_cos - m_new),
                     0.0)
    l_sc[...] = alpha * l_sc[...] + tile_sum + corr
    m_sc[...] = m_new

    # Target logit contributed only by the C-tile that contains the label.
    t_sc[...] = t_sc[...] + jnp.where(has_tgt, s * phi, 0.0)

    if label_smooth > 0.0:
        lin = jnp.sum(s_costh, axis=1, keepdims=True)
        sum_sc[...] = sum_sc[...] + lin + jnp.where(has_tgt, s * (phi - tgt_cos), 0.0)

    @pl.when(c == n_c - 1)
    def _():
        lse = m_sc[...] + jnp.log(l_sc[...])
        nll = lse - t_sc[...]
        if label_smooth > 0.0:
            smooth = lse - sum_sc[...] / num_classes
            nll = (1.0 - label_smooth) * nll + label_smooth * smooth
        nll_ref[...] = nll


def _pick_tile(total, cap, align):
    """Largest t <= cap dividing `total` with t % align == 0 (or t == total)."""
    cap = max(1, min(total, cap))
    for t in range(cap, 0, -1):
        if total % t == 0 and (t % align == 0 or t == total):
            return t
    return total


def arcface_loss(costh, labels, *, m=0.5, s=64.0, label_smooth=0.0,
                 easy_margin=False, tb=None, tc=None):
    """JAX/Pallas equivalent of ArcFace.forward(costh, lb)."""
    B, C = costh.shape
    itemsize = jnp.dtype(costh.dtype).itemsize
    sublane = 16 if itemsize == 2 else (32 if itemsize == 1 else 8)

    if tb is None:
        # Prefer B // tb >= 2 so the "parallel" B axis feeds both v7x TensorCores.
        cap = B // 2 if B >= 2 * sublane else B
        tb = _pick_tile(B, min(max(cap, 1), 256), sublane)
    if tc is None:
        # ~8 MiB per costh buffer (x2 for double-buffering) amortizes step overhead.
        per_buf_bytes = 8 << 20
        tc = _pick_tile(C, max(per_buf_bytes // (itemsize * tb), 128), 128)
    assert B % tb == 0 and C % tc == 0, "B/C must be multiples of the tile sizes"
    if itemsize == 2:
        assert tb % 16 == 0 or tb == B, "bf16 blocks need tb to be a multiple of 16"

    # Explicit VMEM budget: 2x double-buffered costh blocks + headroom for scratch /
    # labels / output, clamped to physical VMEM (v7x: 64 MiB; v5e default scoped 16).
    vmem_need = 2 * tb * tc * itemsize + (4 << 20)
    try:
        phys = pltpu.get_tpu_info().vmem_capacity_bytes
        vmem_limit = min(max(vmem_need, 16 << 20), int(phys * 0.9))
    except Exception:
        vmem_limit = min(max(vmem_need, 16 << 20), 96 << 20)

    kernel = functools.partial(
        _arcface_kernel,
        cos_m=math.cos(m),
        sin_m=math.sin(m),
        th=math.cos(math.pi - m),
        mm=math.sin(math.pi - m) * m,
        s=float(s),
        label_smooth=float(label_smooth),
        easy_margin=bool(easy_margin),
        num_classes=C,
    )
    lb2d = labels.reshape(B, 1).astype(jnp.int32)

    n_scratch = 4 if label_smooth > 0.0 else 3
    scratch_shapes = [pltpu.VMEM((tb, 1), jnp.float32)] * n_scratch

    cost = pl.CostEstimate(
        flops=6 * B * C,
        transcendentals=B * C,
        bytes_accessed=B * C * itemsize + B * 8,
    )

    nll = pl.pallas_call(
        kernel,
        out_shape=jax.ShapeDtypeStruct((B, 1), jnp.float32),
        grid_spec=pltpu.PrefetchScalarGridSpec(
            num_scalar_prefetch=0,
            grid=(B // tb, C // tc),
            in_specs=[
                pl.BlockSpec((tb, 1), lambda b, c: (b, 0)),    # labels
                pl.BlockSpec((tb, tc), lambda b, c: (b, c)),   # costh tile
            ],
            out_specs=pl.BlockSpec((tb, 1), lambda b, c: (b, 0)),
            scratch_shapes=scratch_shapes,
        ),
        compiler_params=pltpu.CompilerParams(
            dimension_semantics=("parallel", "arbitrary"),
            vmem_limit_bytes=int(vmem_limit)),
        cost_estimate=cost,
    )(lb2d, costh)

    return jnp.mean(nll[:, 0])   # CrossEntropyLoss(reduction='mean')


def _arcface_loss_ref(costh, labels, *, m=0.5, s=64.0, label_smooth=0.0,
                      easy_margin=False):
    """Pure-JAX reference for correctness checking."""
    cos_m, sin_m = math.cos(m), math.sin(m)
    th, mm = math.cos(math.pi - m), math.sin(math.pi - m) * m
    costh = costh.astype(jnp.float32)
    sine = jnp.sqrt(jnp.clip(1.0 - costh ** 2, 0.0, 1.0))
    phi = costh * cos_m - sine * sin_m
    if easy_margin:
        phi = jnp.where(costh > 0.0, phi, costh)
    else:
        phi = jnp.where(costh > th, phi, costh - mm)
    one_hot = jax.nn.one_hot(labels, costh.shape[1], dtype=jnp.float32)
    logits = s * (one_hot * phi + (1.0 - one_hot) * costh)
    logp = jax.nn.log_softmax(logits, axis=-1)
    nll = -jnp.take_along_axis(logp, labels[:, None], axis=1)[:, 0]
    if label_smooth > 0.0:
        smooth = -jnp.mean(logp, axis=-1)
        nll = (1.0 - label_smooth) * nll + label_smooth * smooth
    return jnp.mean(nll)


if __name__ == "__main__":
    B, C = 16, 512            # small shapes; tb=8, tc=128 -> grid (2, 4)
    key = jax.random.PRNGKey(0)
    k1, k2 = jax.random.split(key)
    costh = jax.random.uniform(k1, (B, C), jnp.float32, minval=-1.0, maxval=1.0)
    labels = jax.random.randint(k2, (B,), 0, C, dtype=jnp.int32)

    # plain CE, f32 input
    loss = jax.block_until_ready(arcface_loss(costh, labels, tb=8, tc=128))
    ref = jax.block_until_ready(_arcface_loss_ref(costh, labels))
    assert jnp.allclose(loss, ref, rtol=1e-5, atol=1e-4), (loss, ref)

    # label-smoothed CE path
    loss_ls = jax.block_until_ready(
        arcface_loss(costh, labels, label_smooth=0.1, tb=8, tc=128))
    ref_ls = jax.block_until_ready(
        _arcface_loss_ref(costh, labels, label_smooth=0.1))
    assert jnp.allclose(loss_ls, ref_ls, rtol=1e-5, atol=1e-4), (loss_ls, ref_ls)

    # bf16-in-HBM path (halves HBM bytes; f32 compute inside). tb multiple of 16.
    costh_bf16 = costh.astype(jnp.bfloat16)
    loss_bf = jax.block_until_ready(arcface_loss(costh_bf16, labels, tb=16, tc=128))
    ref_bf = jax.block_until_ready(
        _arcface_loss_ref(costh_bf16.astype(jnp.float32), labels))
    assert jnp.allclose(loss_bf, ref_bf, rtol=1e-4, atol=1e-3), (loss_bf, ref_bf)

    print("KERNEL_OK")
</pallas_src>

<mosaic_0001>
module attributes {stable_mosaic.version = 11 : i64} {
  func.func @_arcface_kernel(%arg0: i32, %arg1: i32, %arg2: memref<8x1xi32, #tpu.memory_space<vmem>>, %arg3: memref<8x128xf32, #tpu.memory_space<vmem>>, %arg4: memref<8x1xf32, #tpu.memory_space<vmem>>, %arg5: memref<8x1xf32, #tpu.memory_space<vmem>>, %arg6: memref<8x1xf32, #tpu.memory_space<vmem>>, %arg7: memref<8x1xf32, #tpu.memory_space<vmem>>) attributes {dimension_semantics = [#tpu.dimension_semantics<parallel>, #tpu.dimension_semantics<arbitrary>], iteration_bounds = array<i64: 2, 4>, scalar_prefetch = 0 : i64, scratch_operands = 3 : i64, tpu.core_type = #tpu.core_type<tc>, window_params = [{transform_indices = @transform_0, window_bounds = array<i64: 8, 1>}, {transform_indices = @transform_1, window_bounds = array<i64: 8, 128>}, {transform_indices = @transform_2, window_bounds = array<i64: 8, 1>}]} {
    %c0_i32 = arith.constant 0 : i32
    %0 = arith.cmpi eq, %arg1, %c0_i32 : i32
    %1 = arith.extui %0 : i1 to i32
    %c0_i32_0 = arith.constant 0 : i32
    %2 = arith.cmpi ne, %1, %c0_i32_0 : i32
    scf.if %2 {
      %cst_37 = arith.constant 0xFF800000 : f32
      %79 = vector.broadcast %cst_37 : f32 to vector<8x1xf32>
      %c0_38 = arith.constant 0 : index
      %c0_39 = arith.constant 0 : index
      %80 = vector.load %arg5[%c0_38, %c0_39] : memref<8x1xf32, #tpu.memory_space<vmem>>, vector<8x1xf32>
      tpu.vector_store %arg5[%c0_38, %c0_39], %79 {strides = array<i32>} : memref<8x1xf32, #tpu.memory_space<vmem>>, vector<8x1xf32>,
      %cst_40 = arith.constant 0.000000e+00 : f32
      %81 = vector.broadcast %cst_40 : f32 to vector<8x1xf32>
      %c0_41 = arith.constant 0 : index
      %c0_42 = arith.constant 0 : index
      %82 = vector.load %arg6[%c0_41, %c0_42] : memref<8x1xf32, #tpu.memory_space<vmem>>, vector<8x1xf32>
      tpu.vector_store %arg6[%c0_41, %c0_42], %81 {strides = array<i32>} : memref<8x1xf32, #tpu.memory_space<vmem>>, vector<8x1xf32>,
      %cst_43 = arith.constant 0.000000e+00 : f32
      %83 = vector.broadcast %cst_43 : f32 to vector<8x1xf32>
      %c0_44 = arith.constant 0 : index
      %c0_45 = arith.constant 0 : index
      %84 = vector.load %arg7[%c0_44, %c0_45] : memref<8x1xf32, #tpu.memory_space<vmem>>, vector<8x1xf32>
      tpu.vector_store %arg7[%c0_44, %c0_45], %83 {strides = array<i32>} : memref<8x1xf32, #tpu.memory_space<vmem>>, vector<8x1xf32>,
    } else {
    }
    %c0 = arith.constant 0 : index
    %c0_1 = arith.constant 0 : index
    %3 = vector.load %arg3[%c0, %c0_1] : memref<8x128xf32, #tpu.memory_space<vmem>>, vector<8x128xf32>
    %c0_2 = arith.constant 0 : index
    %c0_3 = arith.constant 0 : index
    %4 = vector.load %arg2[%c0_2, %c0_3] : memref<8x1xi32, #tpu.memory_space<vmem>>, vector<8x1xi32>
    %5 = tpu.iota {dimensions = array<i32: 1>} : vector<8x128xi32>
    %c128_i32 = arith.constant 128 : i32
    %6 = arith.muli %arg1, %c128_i32 : i32
    %7 = vector.broadcast %6 : i32 to vector<8x1xi32>
    %8 = arith.subi %4, %7 : vector<8x1xi32>
    %9 = vector.broadcast %8 : vector<8x1xi32> to vector<8x128xi32>
    %10 = arith.cmpi eq, %5, %9 : vector<8x128xi32>
    %c0_i32_4 = arith.constant 0 : i32
    %11 = vector.broadcast %c0_i32_4 : i32 to vector<8x1xi32>
    %12 = arith.cmpi sge, %8, %11 : vector<8x1xi32>
    %c128_i32_5 = arith.constant 128 : i32
    %13 = vector.broadcast %c128_i32_5 : i32 to vector<8x1xi32>
    %14 = arith.cmpi slt, %8, %13 : vector<8x1xi32>
    %15 = arith.andi %12, %14 : vector<8x1xi1>
    %cst = arith.constant 0.000000e+00 : f32
    %16 = vector.broadcast %cst : f32 to vector<8x128xf32>
    %17 = arith.select %10, %3, %16 : vector<8x128xi1>, vector<8x128xf32>
    %cst_6 = arith.constant dense<0.000000e+00> : vector<8xf32>
    %18 = vector.multi_reduction <add>, %17, %cst_6 [1] : vector<8x128xf32> to vector<8xf32>
    %19 = vector.shape_cast %18 : vector<8xf32> to vector<8x1xf32>
    %20 = arith.mulf %19, %19 : vector<8x1xf32>
    %cst_7 = arith.constant 1.000000e+00 : f32
    %21 = vector.broadcast %cst_7 : f32 to vector<8x1xf32>
    %22 = arith.subf %21, %20 : vector<8x1xf32>
    %cst_8 = arith.constant 0.000000e+00 : f32
    %cst_9 = arith.constant 1.000000e+00 : f32
    %23 = vector.broadcast %cst_8 : f32 to vector<8x1xf32>
    %24 = arith.maximumf %23, %22 : vector<8x1xf32>
    %25 = vector.broadcast %cst_9 : f32 to vector<8x1xf32>
    %26 = arith.minimumf %25, %24 : vector<8x1xf32>
    %27 = math.sqrt %26 : vector<8x1xf32>
    %cst_10 = arith.constant 0.87758255 : f32
    %28 = vector.broadcast %cst_10 : f32 to vector<8x1xf32>
    %29 = arith.mulf %19, %28 : vector<8x1xf32>
    %cst_11 = arith.constant 0.47942555 : f32
    %30 = vector.broadcast %cst_11 : f32 to vector<8x1xf32>
    %31 = arith.mulf %27, %30 : vector<8x1xf32>
    %32 = arith.subf %29, %31 : vector<8x1xf32>
    %cst_12 = arith.constant -0.87758255 : f32
    %33 = vector.broadcast %cst_12 : f32 to vector<8x1xf32>
    %34 = arith.cmpf ogt, %19, %33 : vector<8x1xf32>
    %cst_13 = arith.constant 0.239712775 : f32
    %35 = vector.broadcast %cst_13 : f32 to vector<8x1xf32>
    %36 = arith.subf %19, %35 : vector<8x1xf32>
    %37 = arith.select %34, %32, %36 : vector<8x1xi1>, vector<8x1xf32>
    %cst_14 = arith.constant 6.400000e+01 : f32
    %38 = vector.broadcast %cst_14 : f32 to vector<8x128xf32>
    %39 = arith.mulf %38, %3 : vector<8x128xf32>
    %cst_15 = arith.constant dense<0xFF800000> : vector<8xf32>
    %40 = vector.multi_reduction <maximumf>, %39, %cst_15 [1] : vector<8x128xf32> to vector<8xf32>
    %41 = vector.shape_cast %40 : vector<8xf32> to vector<8x1xf32>
    %c0_16 = arith.constant 0 : index
    %c0_17 = arith.constant 0 : index
    %42 = vector.load %arg5[%c0_16, %c0_17] : memref<8x1xf32, #tpu.memory_space<vmem>>, vector<8x1xf32>
    %43 = arith.maximumf %42, %41 : vector<8x1xf32>
    %c0_18 = arith.constant 0 : index
    %c0_19 = arith.constant 0 : index
    %44 = vector.load %arg5[%c0_18, %c0_19] : memref<8x1xf32, #tpu.memory_space<vmem>>, vector<8x1xf32>
    %45 = arith.subf %44, %43 : vector<8x1xf32>
    %46 = math.exp %45 : vector<8x1xf32>
    %47 = vector.broadcast %43 : vector<8x1xf32> to vector<8x128xf32>
    %48 = arith.subf %39, %47 : vector<8x128xf32>
    %49 = math.exp %48 : vector<8x128xf32>
    %cst_20 = arith.constant dense<0.000000e+00> : vector<8xf32>
    %50 = vector.multi_reduction <add>, %49, %cst_20 [1] : vector<8x128xf32> to vector<8xf32>
    %51 = vector.shape_cast %50 : vector<8xf32> to vector<8x1xf32>
    %cst_21 = arith.constant 6.400000e+01 : f32
    %52 = vector.broadcast %cst_21 : f32 to vector<8x1xf32>
    %53 = arith.mulf %52, %37 : vector<8x1xf32>
    %54 = arith.subf %53, %43 : vector<8x1xf32>
    %55 = math.exp %54 : vector<8x1xf32>
    %cst_22 = arith.constant 6.400000e+01 : f32
    %56 = vector.broadcast %cst_22 : f32 to vector<8x1xf32>
    %57 = arith.mulf %56, %19 : vector<8x1xf32>
    %58 = arith.subf %57, %43 : vector<8x1xf32>
    %59 = math.exp %58 : vector<8x1xf32>
    %60 = arith.subf %55, %59 : vector<8x1xf32>
    %cst_23 = arith.constant 0.000000e+00 : f32
    %61 = vector.broadcast %cst_23 : f32 to vector<8x1xf32>
    %62 = arith.select %15, %60, %61 : vector<8x1xi1>, vector<8x1xf32>
    %c0_24 = arith.constant 0 : index
    %c0_25 = arith.constant 0 : index
    %63 = vector.load %arg6[%c0_24, %c0_25] : memref<8x1xf32, #tpu.memory_space<vmem>>, vector<8x1xf32>
    %64 = arith.mulf %46, %63 : vector<8x1xf32>
    %65 = arith.addf %64, %51 : vector<8x1xf32>
    %66 = arith.addf %65, %62 : vector<8x1xf32>
    %c0_26 = arith.constant 0 : index
    %c0_27 = arith.constant 0 : index
    %67 = vector.load %arg6[%c0_26, %c0_27] : memref<8x1xf32, #tpu.memory_space<vmem>>, vector<8x1xf32>
    tpu.vector_store %arg6[%c0_26, %c0_27], %66 {strides = array<i32>} : memref<8x1xf32, #tpu.memory_space<vmem>>, vector<8x1xf32>,
    %c0_28 = arith.constant 0 : index
    %c0_29 = arith.constant 0 : index
    %68 = vector.load %arg5[%c0_28, %c0_29] : memref<8x1xf32, #tpu.memory_space<vmem>>, vector<8x1xf32>
    tpu.vector_store %arg5[%c0_28, %c0_29], %43 {strides = array<i32>} : memref<8x1xf32, #tpu.memory_space<vmem>>, vector<8x1xf32>,
    %c0_30 = arith.constant 0 : index
    %c0_31 = arith.constant 0 : index
    %69 = vector.load %arg7[%c0_30, %c0_31] : memref<8x1xf32, #tpu.memory_space<vmem>>, vector<8x1xf32>
    %cst_32 = arith.constant 6.400000e+01 : f32
    %70 = vector.broadcast %cst_32 : f32 to vector<8x1xf32>
    %71 = arith.mulf %70, %37 : vector<8x1xf32>
    %cst_33 = arith.constant 0.000000e+00 : f32
    %72 = vector.broadcast %cst_33 : f32 to vector<8x1xf32>
    %73 = arith.select %15, %71, %72 : vector<8x1xi1>, vector<8x1xf32>
    %74 = arith.addf %69, %73 : vector<8x1xf32>
    %c0_34 = arith.constant 0 : index
    %c0_35 = arith.constant 0 : index
    %75 = vector.load %arg7[%c0_34, %c0_35] : memref<8x1xf32, #tpu.memory_space<vmem>>, vector<8x1xf32>
    tpu.vector_store %arg7[%c0_34, %c0_35], %74 {strides = array<i32>} : memref<8x1xf32, #tpu.memory_space<vmem>>, vector<8x1xf32>,
    %c3_i32 = arith.constant 3 : i32
    %76 = arith.cmpi eq, %arg1, %c3_i32 : i32
    %77 = arith.extui %76 : i1 to i32
    %c0_i32_36 = arith.constant 0 : i32
    %78 = arith.cmpi ne, %77, %c0_i32_36 : i32
    scf.if %78 {
      %c0_37 = arith.constant 0 : index
      %c0_38 = arith.constant 0 : index
      %79 = vector.load %arg5[%c0_37, %c0_38] : memref<8x1xf32, #tpu.memory_space<vmem>>, vector<8x1xf32>
      %c0_39 = arith.constant 0 : index
      %c0_40 = arith.constant 0 : index
      %80 = vector.load %arg6[%c0_39, %c0_40] : memref<8x1xf32, #tpu.memory_space<vmem>>, vector<8x1xf32>
      %81 = math.log %80 : vector<8x1xf32>
      %82 = arith.addf %79, %81 : vector<8x1xf32>
      %c0_41 = arith.constant 0 : index
      %c0_42 = arith.constant 0 : index
      %83 = vector.load %arg7[%c0_41, %c0_42] : memref<8x1xf32, #tpu.memory_space<vmem>>, vector<8x1xf32>
      %84 = arith.subf %82, %83 : vector<8x1xf32>
      %c0_43 = arith.constant 0 : index
      %c0_44 = arith.constant 0 : index
      %85 = vector.load %arg4[%c0_43, %c0_44] : memref<8x1xf32, #tpu.memory_space<vmem>>, vector<8x1xf32>
      tpu.vector_store %arg4[%c0_43, %c0_44], %84 {strides = array<i32>} : memref<8x1xf32, #tpu.memory_space<vmem>>, vector<8x1xf32>,
    } else {
    }
    return
  }
  func.func @transform_0(%arg0: i32, %arg1: i32) -> (i32, i32) {
    %c0_i32 = arith.constant 0 : i32
    %c0_i32_0 = arith.constant 0 : i32
    return %arg0, %c0_i32 : i32, i32
  }
  func.func @transform_1(%arg0: i32, %arg1: i32) -> (i32, i32) {
    %c0_i32 = arith.constant 0 : i32
    return %arg0, %arg1 : i32, i32
  }
  func.func @transform_2(%arg0: i32, %arg1: i32) -> (i32, i32) {
    %c0_i32 = arith.constant 0 : i32
    %c0_i32_0 = arith.constant 0 : i32
    return %arg0, %c0_i32 : i32, i32
  }
}

</mosaic_0001>

<llo_original>
// kernel: tpu_custom_call.1
$region0: #{tpu_custom_call.1}
  #allocation0 [shape = 'u32[]', space=smem, size = 0x4, offset = 0x4, fixed_abs, tag = 'smem constant byte address 0x4 - core index']
  #allocation1 [shape = 'u32[144,128]{1,0:T(1,128)}', space=vmem, size = 0x12000, scoped, tag = 'internal scratch']
  #allocation2 [shape = 'f32[8,1]{1,0:T(8,128)}', space=vmem, size = 0x1000, scoped, tag = 'scratch operand']
  #allocation3 [shape = 'f32[8,1]{1,0:T(8,128)}', space=vmem, size = 0x1000, scoped, tag = 'scratch operand']
  #allocation4 [shape = 'f32[8,1]{1,0:T(8,128)}', space=vmem, size = 0x1000, scoped, tag = 'scratch operand']
  %s0 = inlined_call_operand.vmem [shape: s32[16,1], index: 0, kind: input, shape index: {}]
  %s1 = inlined_call_operand.hbm [shape: f32[16,512], index: 1, kind: input, shape index: {}]
  %s2 = inlined_call_operand.vmem [shape: f32[16,1], index: 2, kind: output, shape index: {}]
  %s3 = sld [smem:[#allocation0]]
  $region53: #{tpu_custom_call.1} parent=0
    _
  %s5 = ssub.s32 1, %s3
  %s6 = scalar_select 0, %s5, %s3
  $region1: #{tpu_custom_call.1} parent=0
    #allocation5 [shape = 'u8[8192]{0}', space=vmem, size = 0x2000, scoped, tag = 'input window, operand 1']
    #allocation6 [shape = 's32[2]{0}', space=sflag, size = 0x8, scoped, tag = 'scoped memory for tpu_custom_call.1']
    %7 = vsyncpa [#allocation6], 0
    %s8 = scalar_lea.sflag [#allocation6], 1
    %9 = vsyncpa %s8, 0
    loop: start=0, step=1, limit=10
    $region2: #{tpu_custom_call.1} parent=1 // loop_pre_header
      _
    $region3: #{tpu_custom_call.1} parent=1 // loop_header
      %s11 = sphi 0, %s15
      %p12 = scmp.ge.s32.totalorder %s11, 10
      %s18 = sphi 0, %s30
      %s19 = sphi 0, %s26
      %s20 = sphi 0, %s18
      %s21 = sphi 0, %s19
      %s22 = sphi 0, %s20
      %s23 = sphi 0, %s21
      %s33 = sphi 0, %s35
      %s36 = sphi 0, %s33
      %s37 = sphi 0, %s36
      %s53 = sphi 0, %s37
      %s61 = sphi 0, %s63
      %s64 = sphi 0, %s61
      %s65 = sphi 0, %s64
      %s81 = sphi 0, %s65
      %s87 = sphi 0, %s89
      %s90 = sphi 0, %s87
      %s91 = sphi 0, %s90
      %s107 = sphi 0, %s91
    $region4: #{tpu_custom_call.1} parent=1 // loop_header_branch
      %14 = sbr.rel (%p12) target = $region8
    $region5: #{tpu_custom_call.1} parent=1 // loop_body
      %s16 = ssub.s32 %s11, 1
      %s17 = ssub.s32 %s11, 2
      %s24 = sadd.s32 1, %s19
      %p25 = scmp.ge.s32.totalorder %s24, 4
      %s26 = scalar_select %p25, 0, %s24
      %s27 = sadd.s32 1, %s18
      %s28 = scalar_select %p25, %s27, %s18
      %p29 = scmp.ge.s32.totalorder %s28, 2
      %s30 = scalar_select %p29, 0, %s28
      %s31 = ssub.s32 %s18, %s30
      %p32 = scmp.eq.s32.totalorder %s31, 0
      %s34 = sadd.s32 %s33, 1
      %s35 = scalar_select %p32, %s33, %s34
      %p38 = pneg %p32
      %p39 = scmp.eq.s32.totalorder %s11, 7
      %p40 = por %p38, %p39
      %p41 = scmp.ne.s32.totalorder %s33, %s36
      %p42 = scmp.eq.s32.totalorder %s11, 0
      %p43 = por %p41, %p42
      %p44 = scmp.ne.s32.totalorder %s33, %s36
      %p45 = scmp.eq.s32.totalorder %s16, 7
      %p46 = por %p44, %p45
      %p47 = scmp.ne.s32.totalorder %s36, %s37
      %p48 = scmp.eq.s32.totalorder %s16, 0
      %p49 = por %p47, %p48
      %p50 = scmp.ne.s32.totalorder %s36, %s37
      %p51 = scmp.eq.s32.totalorder %s17, 7
      %p52 = por %p50, %p51
      %p54 = scmp.ne.s32.totalorder %s37, %s53
      %p55 = scmp.eq.s32.totalorder %s17, 0
      %p56 = por %p54, %p55
      %s57 = ssub.s32 %s18, %s30
      %s58 = ssub.s32 %s19, %s26
      %s59 = sor.u32 %s57, %s58
      %p60 = scmp.eq.s32.totalorder %s59, 0
      %s62 = sadd.s32 %s61, 1
      %s63 = scalar_select %p60, %s61, %s62
      %p66 = pneg %p60
      %p67 = scmp.eq.s32.totalorder %s11, 7
      %p68 = por %p66, %p67
      %p69 = scmp.ne.s32.totalorder %s61, %s64
      %p70 = scmp.eq.s32.totalorder %s11, 0
      %p71 = por %p69, %p70
      %p72 = scmp.ne.s32.totalorder %s61, %s64
      %p73 = scmp.eq.s32.totalorder %s16, 7
      %p74 = por %p72, %p73
      %p75 = scmp.ne.s32.totalorder %s64, %s65
      %p76 = scmp.eq.s32.totalorder %s16, 0
      %p77 = por %p75, %p76
      %p78 = scmp.ne.s32.totalorder %s64, %s65
      %p79 = scmp.eq.s32.totalorder %s17, 7
      %p80 = por %p78, %p79
      %p82 = scmp.ne.s32.totalorder %s65, %s81
      %p83 = scmp.eq.s32.totalorder %s17, 0
      %p84 = por %p82, %p83
      %s85 = ssub.s32 %s18, %s30
      %p86 = scmp.eq.s32.totalorder %s85, 0
      %s88 = sadd.s32 %s87, 1
      %s89 = scalar_select %p86, %s87, %s88
      %p92 = pneg %p86
      %p93 = scmp.eq.s32.totalorder %s11, 7
      %p94 = por %p92, %p93
      %p95 = scmp.ne.s32.totalorder %s87, %s90
      %p96 = scmp.eq.s32.totalorder %s11, 0
      %p97 = por %p95, %p96
      %p98 = scmp.ne.s32.totalorder %s87, %s90
      %p99 = scmp.eq.s32.totalorder %s16, 7
      %p100 = por %p98, %p99
      %p101 = scmp.ne.s32.totalorder %s90, %s91
      %p102 = scmp.eq.s32.totalorder %s16, 0
      %p103 = por %p101, %p102
      %p104 = scmp.ne.s32.totalorder %s90, %s91
      %p105 = scmp.eq.s32.totalorder %s17, 7
      %p106 = por %p104, %p105
      %p108 = scmp.ne.s32.totalorder %s91, %s107
      %p109 = scmp.eq.s32.totalorder %s17, 0
      %p110 = por %p108, %p109
      %p111 = scmp.le.s32.totalorder 1, %s11
      %p112 = scmp.lt.s32.totalorder %s11, 9
      %p113 = pnand %p111, %p112
      %p114 = pneg %p113
      // Predicated region
      $region9: #{tpu_custom_call.1} parent=5 // pred_check
        _
      $region10: #{tpu_custom_call.1} parent=5 // pred_check_branch
        %116 = sbr.rel (%p113) target = $region12
      $region11: #{tpu_custom_call.1} parent=5 // pred_region
        %s117 = ssub.s32 %s11, 1
      $region12: #{tpu_custom_call.1} parent=5 // pred_fallthru
        _
      %p118 = scmp.lt.s32.totalorder %s11, 8
      // Predicated region
      $region13: #{tpu_custom_call.1} parent=5 // pred_check
        %p119 = pneg %p118
      $region14: #{tpu_custom_call.1} parent=5 // pred_check_branch
        %121 = sbr.rel (%p119) target = $region16
      $region15: #{tpu_custom_call.1} parent=5 // pred_region
        // Predicated region
        $region17: #{tpu_custom_call.1} parent=15 // pred_check
          %p122 = pneg %p43
        $region18: #{tpu_custom_call.1} parent=15 // pred_check_branch
          %124 = sbr.rel (%p122) target = $region20
        $region19: #{tpu_custom_call.1} parent=15 // pred_region
          %p125 = scmp.lt.s32.totalorder %s18, 1
          %s126 = scalar_select %p125, %s18, 1
          %s127 = smul.addr %s126, 8
          %s128 = scalar_lea.vmem %s0, %s127
        $region20: #{tpu_custom_call.1} parent=15 // pred_fallthru
          _
        // Predicated region
        $region21: #{tpu_custom_call.1} parent=15 // pred_check
          %p129 = pneg %p71
        $region22: #{tpu_custom_call.1} parent=15 // pred_check_branch
          %131 = sbr.rel (%p129) target = $region24
        $region23: #{tpu_custom_call.1} parent=15 // pred_region
          %s132 = sand.u32 %s61, 1
          %s133 = scalar_lea.sflag [#allocation6], %s132
          %s134 = sand.u32 %s61, 1
          %s135 = smul.addr %s134, 8
          %s136 = scalar_lea.vmem [#allocation5], %s135
          %s138 = ssub.s32 128, 128
          %139 = vsyncadd %s133, %s138
          %s140 = smul.addr %s18, 4
          %s141 = sadd.s32 %s19, %s140
          %s142 = smul.addr %s141, 128
          %s143 = scalar_lea.hbm %s1, %s142
          %s145 = sshll.u32 %s136, 4
          %s146 = int_to_ptr.vmem [resolvable:$true] %s145
          %148 = dma.hbm_to_vmem [thread:$0]  %s143, 128, %s146, %s133
        $region24: #{tpu_custom_call.1} parent=15 // pred_fallthru
          _
      $region16: #{tpu_custom_call.1} parent=5 // pred_fallthru
        _
      %p149 = scmp.le.s32.totalorder 1, %s11
      %p150 = scmp.lt.s32.totalorder %s11, 9
      %p151 = pnand %p149, %p150
      %p152 = pneg %p151
      // Predicated region
      $region25: #{tpu_custom_call.1} parent=5 // pred_check
        _
      $region26: #{tpu_custom_call.1} parent=5 // pred_check_branch
        %154 = sbr.rel (%p151) target = $region28
      $region27: #{tpu_custom_call.1} parent=5 // pred_region
        %s155 = ssub.s32 %s11, 1
        %s156 = sand.u32 %s64, 1
        %s157 = scalar_lea.sflag [#allocation6], %s156
        %s158 = sand.u32 %s64, 1
        %s159 = smul.addr %s158, 8
        %s160 = scalar_lea.vmem [#allocation5], %s159
        // Predicated region
        $region29: #{tpu_custom_call.1} parent=27 // pred_check
          %p161 = pneg %p77
        $region30: #{tpu_custom_call.1} parent=27 // pred_check_branch
          %163 = sbr.rel (%p161) target = $region32
        $region31: #{tpu_custom_call.1} parent=27 // pred_region
          %164 = dma.done %s157, 128
        $region32: #{tpu_custom_call.1} parent=27 // pred_fallthru
          _
        %p165 = scmp.lt.s32.totalorder %s20, 1
        %s166 = scalar_select %p165, %s20, 1
        %s167 = smul.addr %s166, 8
        %s168 = scalar_lea.vmem %s0, %s167
        %p169 = pneg %p49
        %p170 = pneg %p46
        %s171 = sand.u32 %s64, 1
        %s172 = scalar_lea.sflag [#allocation6], %s171
        %s173 = sand.u32 %s64, 1
        %s174 = smul.addr %s173, 8
        %s175 = scalar_lea.vmem [#allocation5], %s174
        %p176 = pneg %p77
        %p177 = pneg %p74
        %p178 = pneg %p103
        %p179 = pneg %p100
        %p180 = scmp.lt.s32.totalorder %s20, 1
        %s181 = scalar_select %p180, %s20, 1
        %s182 = smul.addr %s181, 8
        %s183 = scalar_lea.vmem %s2, %s182
        %p184 = scmp.lt.s32.totalorder %s20, 1
        %s185 = scalar_select %p184, %s20, 1
        %s186 = smul.addr %s185, 8
        %s187 = scalar_lea.vmem %s0, %s186
        %p188 = scmp.lt.s32.totalorder %s20, 1
        %s189 = scalar_select %p188, %s20, 1
        %s190 = smul.addr %s189, 8
        %s191 = scalar_lea.vmem %s2, %s190
        %p192 = scmp.eq.s32.totalorder %s21, 0
        // Predicated region
        $region33: #{tpu_custom_call.1} parent=27 // pred_check
          %p193 = pneg %p192
        $region34: #{tpu_custom_call.1} parent=27 // pred_check_branch
          %195 = sbr.rel (%p193) target = $region36
        $region35: #{tpu_custom_call.1} parent=27 // pred_region
          %vm196 = vcmask 7168
          %197 = vst.msk [vmem:[#allocation2] sm:$0xff] %vm196, -inf
          %198 = vst.msk [vmem:[#allocation3] sm:$0xff] %vm196, 0.0
          %199 = vst.msk [vmem:[#allocation4] sm:$0xff] %vm196, 0.0
        $region36: #{tpu_custom_call.1} parent=27 // pred_fallthru
          _
        %v200 = vld [vmem:[%s160] sm:$0xff]
        %v201 = vld [vmem:[%s187] sm:$0xff]
        %v202 = vlaneseq
        %v203 = vand.u32 %v202, 127
        %s204 = smul.u32 %s21, 128
        %v205 = vstv %s204
        %v206 = vsub.s32 %v201, %v205
        %207 = vset.pattern.permute.xlu0 0
        %208 = vperm.xlu0 %207, %v206
        %v209 = vpop.permute.xlu0 %208
        %vm210 = vcmp.eq.s32.totalorder %v203, %v209
        %vm211 = vcmp.ge.s32.totalorder %v206, 0
        %vm212 = vcmp.lt.s32.totalorder %v206, 128
        %vm213 = vmand %vm211, %vm212
        %v214 = vsel %vm210, %v200, 0.0
        %215 = vadd.xlane.f32.xlu0 %v214
        %v216 = vpop.xlane.xlu0 %215
        %v217 = vmul.f32 %v216, %v216
        %v218 = vsub.f32 1.0, %v217
        %v219 = vmax.f32 %v218, 0.0
        %v220 = vmin.f32 %v219, 1.0
        %v221 = vrsqrt.pop %v220
        %v222 = vmul.f32 %v220, %v221
        %vm223 = vcmp.eq.f32.partialorder %v220, inf
        %v224 = vsel %vm223, %v220, %v222
        %vm225 = vcmp.eq.f32.partialorder %v220, 0.0
        %v226 = vand.u32 %v220, 2147483648
        %v227 = vsel %vm225, %v226, %v224
        %v228 = vmul.f32 %v216, 0.87758255
        %v229 = vmul.f32 %v227, 0.47942555
        %v230 = vsub.f32 %v228, %v229
        %vm231 = vcmp.gt.f32.partialorder %v216, -0.87758255
        %v232 = vsub.f32 %v216, 0.23971277
        %v233 = vsel %vm231, %v230, %v232
        %v234 = vmul.f32 %v200, 64.0
        %235 = vmax.xlane.f32.xlu0 %v234
        %v236 = vpop.xlane.xlu0 %235
        %v237 = vld [vmem:[#allocation2] sm:$0xff]
        %v238 = vmax.f32 %v237, %v236
        %v239 = vsub.f32 %v237, %v238
        %v240 = vmul.f32 %v239, 1.442695
        %v241 = vpow.pop %v240
        %243 = vset.pattern.permute.xlu0 0
        %244 = vperm.xlu0 %243, %v238
        %v245 = vpop.permute.xlu0 %244
        %v247 = vsub.f32 %v234, %v245
        %v248 = vmul.f32 %v247, 1.442695
        %v249 = vpow.pop %v248
        %250 = vadd.xlane.f32.xlu0 %v249
        %v251 = vpop.xlane.xlu0 %250
        %v252 = vmul.f32 %v233, 64.0
        %v253 = vsub.f32 %v252, %v238
        %v254 = vmul.f32 %v253, 1.442695
        %v255 = vpow.pop %v254
        %v256 = vmul.f32 %v216, 64.0
        %v257 = vsub.f32 %v256, %v238
        %v258 = vmul.f32 %v257, 1.442695
        %v259 = vpow.pop %v258
        %v260 = vsub.f32 %v255, %v259
        %v261 = vsel %vm213, %v260, 0.0
        %v262 = vld [vmem:[#allocation3] sm:$0xff]
        %v263 = vmul.f32 %v241, %v262
        %v264 = vadd.f32 %v263, %v251
        %v265 = vadd.f32 %v264, %v261
        %vm266 = vcmask 7168
        %267 = vst.msk [vmem:[#allocation3] sm:$0xff] %vm266, %v265
        %268 = vst.msk [vmem:[#allocation2] sm:$0xff] %vm266, %v238
        %v269 = vld [vmem:[#allocation4] sm:$0xff]
        %v270 = vsel %vm213, %v252, 0.0
        %v271 = vadd.f32 %v269, %v270
        %272 = vst.msk [vmem:[#allocation4] sm:$0xff] %vm266, %v271
        %p273 = scmp.eq.s32.totalorder %s21, 3
        // Predicated region
        $region37: #{tpu_custom_call.1} parent=27 // pred_check
          %p274 = pneg %p273
        $region38: #{tpu_custom_call.1} parent=27 // pred_check_branch
          %276 = sbr.rel (%p274) target = $region40
        $region39: #{tpu_custom_call.1} parent=27 // pred_region
          %v277 = vld [vmem:[#allocation2] sm:$0xff]
          %v278 = vld [vmem:[#allocation3] sm:$0xff]
          %v279 = vlog2.pop %v278
          %v280 = vmul.f32 %v279, 0.6931472
          %v281 = vadd.f32 %v277, %v280
          %v282 = vld [vmem:[#allocation4] sm:$0xff]
          %v283 = vsub.f32 %v281, %v282
          %284 = vst.msk [vmem:[%s191] sm:$0xff] %vm266, %v283
        $region40: #{tpu_custom_call.1} parent=27 // pred_fallthru
          _
        %p285 = scmp.lt.s32.totalorder %s20, 1
        %s286 = scalar_select %p285, %s20, 1
        %s287 = smul.addr %s286, 8
        %s288 = scalar_lea.vmem %s2, %s287
        // Predicated region
        $region41: #{tpu_custom_call.1} parent=27 // pred_check
          %p289 = pneg %p100
        $region42: #{tpu_custom_call.1} parent=27 // pred_check_branch
          %291 = sbr.rel (%p289) target = $region44
        $region43: #{tpu_custom_call.1} parent=27 // pred_region
          _
        $region44: #{tpu_custom_call.1} parent=27 // pred_fallthru
          _
      $region28: #{tpu_custom_call.1} parent=5 // pred_fallthru
        _
      %p292 = scmp.le.s32.totalorder 2, %s11
      // Predicated region
      $region45: #{tpu_custom_call.1} parent=5 // pred_check
        %p293 = pneg %p292
      $region46: #{tpu_custom_call.1} parent=5 // pred_check_branch
        %295 = sbr.rel (%p293) target = $region48
      $region47: #{tpu_custom_call.1} parent=5 // pred_region
        %s296 = ssub.s32 %s11, 2
        // Predicated region
        $region49: #{tpu_custom_call.1} parent=47 // pred_check
          %p297 = pneg %p106
        $region50: #{tpu_custom_call.1} parent=47 // pred_check_branch
          %299 = sbr.rel (%p297) target = $region52
        $region51: #{tpu_custom_call.1} parent=47 // pred_region
          %p300 = scmp.lt.s32.totalorder %s22, 1
          %s301 = scalar_select %p300, %s22, 1
          %s302 = smul.addr %s301, 8
          %s303 = scalar_lea.vmem %s2, %s302
        $region52: #{tpu_custom_call.1} parent=47 // pred_fallthru
          _
      $region48: #{tpu_custom_call.1} parent=5 // pred_fallthru
        _
    $region6: #{tpu_custom_call.1} parent=1 // loop_footer
      %s15 = sadd.s32 1, %s11
    $region7: #{tpu_custom_call.1} parent=1 // loop_footer_branch
      %10 = sbr.rel target = $region3
    $region8: #{tpu_custom_call.1} parent=1 // loop_exit
      _
    %304 = vsyncpa [#allocation6], 1
    %s305 = scalar_lea.sflag [#allocation6], 1
    %306 = vsyncpa %s305, 1

</llo_original>
